<compile_context>
chip_gen: v7x
topology: tpu7x:2x2x1
jax: 0.10.0
libtpu: 0.0.40
codegen_flags: <defaults>
</compile_context>

<pallas_src>
import functools

import jax
import jax.numpy as jnp
from jax.experimental import pallas as pl
from jax.experimental.pallas import tpu as pltpu


def _round_up(v, m):
    return (v + m - 1) // m * m


def _snn_fused_kernel(relu_ref, x_ref, lcat_ref, w_ref, o_ref, act_ref, z_ref, *,
                      n_layers, n_pad, c_pad, conv_order_down, conv_order_up):
    """One grid step == one SNN layer; activation carried across steps in VMEM scratch."""
    l = pl.program_id(0)
    f32 = jnp.float32

    @pl.when(l == 0)
    def _():
        act_ref[...] = x_ref[...]

    x = act_ref[...]                                        # (n_pad, c_pad), bf16

    if conv_order_down == 1 and conv_order_up == 1:
        # One wide matmul:  [x@W0 | x@Wd | x@Wu]  (N = 3*c_pad MXU columns).
        proj = jnp.dot(x, w_ref[...], preferred_element_type=f32)
        y = proj[:, 0:c_pad]
        # Reassociated + fused Laplacian term: [Ld | Lu] @ [[x@Wd],[x@Wu]]  (one long-K matmul).
        z_ref[0:n_pad, :] = proj[:, c_pad:2 * c_pad].astype(z_ref.dtype)
        z_ref[n_pad:2 * n_pad, :] = proj[:, 2 * c_pad:3 * c_pad].astype(z_ref.dtype)
        y = y + jnp.dot(lcat_ref[...], z_ref[...], preferred_element_type=f32)
    else:
        # General Chebyshev chains (not exercised by the default conv_order = 1/1 config).
        y = jnp.dot(x, w_ref[:, 0:c_pad], preferred_element_type=f32)
        k = 1
        off = 0
        if conv_order_down > 0:
            ld = lcat_ref[:, off:off + n_pad]
            off += n_pad
            xt = x
            for _ in range(conv_order_down):
                xt = jnp.dot(ld, xt, preferred_element_type=f32).astype(x.dtype)
                y = y + jnp.dot(xt, w_ref[:, k * c_pad:(k + 1) * c_pad],
                                preferred_element_type=f32)
                k += 1
        if conv_order_up > 0:
            lu = lcat_ref[:, off:off + n_pad]
            xt = x
            for _ in range(conv_order_up):
                xt = jnp.dot(lu, xt, preferred_element_type=f32).astype(x.dtype)
                y = y + jnp.dot(xt, w_ref[:, k * c_pad:(k + 1) * c_pad],
                                preferred_element_type=f32)
                k += 1

    do_relu = relu_ref[l] == 1
    last = l == n_layers - 1

    # Intermediate layers: write the (optionally relu'd) activation for the next layer.
    @pl.when(jnp.logical_not(last))
    def _():
        @pl.when(do_relu)
        def _():
            act_ref[...] = jnp.maximum(y, 0.0).astype(act_ref.dtype)

        @pl.when(jnp.logical_not(do_relu))
        def _():
            act_ref[...] = y.astype(act_ref.dtype)

    # Last layer: only write the output (no dead activation-carry store).
    @pl.when(last)
    def _():
        @pl.when(do_relu)
        def _():
            o_ref[...] = jnp.maximum(y, 0.0).astype(o_ref.dtype)

        @pl.when(jnp.logical_not(do_relu))
        def _():
            o_ref[...] = y.astype(o_ref.dtype)


def snn_forward(params, x, lap_down, lap_up, *, conv_order_down=1, conv_order_up=1,
                compute_dtype=jnp.bfloat16):
    """Fused forward pass of the whole SNN stack in a single pallas_call."""
    cd, cu = conv_order_down, conv_order_up
    if cd < 1 and cu < 1:
        raise ValueError("at least one of conv_order_down / conv_order_up must be >= 1")
    k_terms = 1 + cd + cu
    n_layers = len(params)

    for p in params:
        if p["update_func"] not in (None, "id", "identity", "relu"):
            raise NotImplementedError(f"update_func {p['update_func']!r} not supported")
        assert p["weight"].shape[2] == k_terms

    n, c_in = x.shape
    assert params[0]["weight"].shape[0] == c_in
    c_out_final = params[-1]["weight"].shape[1]

    c_pad = _round_up(max(max(p["weight"].shape[0], p["weight"].shape[1]) for p in params), 128)
    n_pad = _round_up(n, 128)

    # Padded, lane-dense activation input (bf16).
    x_p = jnp.zeros((n_pad, c_pad), compute_dtype)
    x_p = x_p.at[:n, :c_in].set(x.astype(compute_dtype))

    # Fused Laplacian operand [L_down | L_up] (only the active ones), zero padded.
    laps = ([lap_down] if cd > 0 else []) + ([lap_up] if cu > 0 else [])
    lcat_cols = len(laps) * n_pad
    lcat = jnp.zeros((n_pad, lcat_cols), compute_dtype)
    for i, lap in enumerate(laps):
        lcat = lcat.at[:n, i * n_pad:i * n_pad + n].set(lap.astype(compute_dtype))

    # Stacked, zero-padded, lane-concatenated weights: (n_layers, c_pad, K*c_pad).
    # Slot k holds torch's weight[:, :, k] (k=0 identity, then down powers, then up powers).
    w_all = jnp.zeros((n_layers, c_pad, k_terms * c_pad), compute_dtype)
    for li, p in enumerate(params):
        w = p["weight"]                                     # (cin, cout, K)
        cin, cout, _ = w.shape
        for k in range(k_terms):
            w_all = w_all.at[li, :cin, k * c_pad:k * c_pad + cout].set(
                w[:, :, k].astype(compute_dtype))

    relu_flags = jnp.array(
        [1 if p["update_func"] == "relu" else 0 for p in params], jnp.int32)

    kernel = functools.partial(
        _snn_fused_kernel,
        n_layers=n_layers, n_pad=n_pad, c_pad=c_pad,
        conv_order_down=cd, conv_order_up=cu)

    # VMEM budget computed from the actual residency (single-buffered constants,
    # double-buffered weight block, scratch, live f32 temporaries) + headroom.
    bf = 2
    f32b = 4
    resident_bytes = (
        n_pad * lcat_cols * bf                 # lcat (Buffered(1))
        + n_pad * c_pad * bf                   # x    (Buffered(1))
        + n_pad * c_pad * f32b                 # out, f32 (Buffered(1))
        + 2 * c_pad * k_terms * c_pad * bf     # per-layer weight block, double-buffered
        + n_pad * c_pad * bf                   # act scratch
        + 2 * n_pad * c_pad * bf               # z scratch
        + n_pad * k_terms * c_pad * f32b       # live f32 proj value
        + 2 * n_pad * c_pad * f32b             # y accumulator + misc temporaries
    )
    vmem_limit_bytes = min(max(int(resident_bytes * 1.15), 16 * 1024 * 1024),
                           127 * 1024 * 1024)

    grid_spec = pltpu.PrefetchScalarGridSpec(
        num_scalar_prefetch=1,
        grid=(n_layers,),
        in_specs=[
            # Constant index maps -> DMA'd once, VMEM-resident, single-buffered.
            pl.BlockSpec((n_pad, c_pad), lambda l, relu: (0, 0),
                         pipeline_mode=pl.Buffered(1)),                       # x
            pl.BlockSpec((n_pad, lcat_cols), lambda l, relu: (0, 0),
                         pipeline_mode=pl.Buffered(1)),                       # [Ld | Lu]
            # Per-layer weight block, streamed (pipelined) along the layer axis.
            pl.BlockSpec((None, c_pad, k_terms * c_pad), lambda l, relu: (l, 0, 0)),
        ],
        out_specs=pl.BlockSpec((n_pad, c_pad), lambda l, relu: (0, 0),
                               pipeline_mode=pl.Buffered(1)),
        scratch_shapes=[
            pltpu.VMEM((n_pad, c_pad), compute_dtype),       # activation carried across layers
            pltpu.VMEM((2 * n_pad, c_pad), compute_dtype),   # stacked [x@Wd ; x@Wu]
        ],
    )

    out_padded = pl.pallas_call(
        kernel,
        out_shape=jax.ShapeDtypeStruct((n_pad, c_pad), jnp.float32),
        grid_spec=grid_spec,
        compiler_params=pltpu.CompilerParams(
            dimension_semantics=("arbitrary",),              # layer axis is strictly sequential
            vmem_limit_bytes=vmem_limit_bytes),
    )(relu_flags, x_p, lcat, w_all)

    return out_padded[:n, :c_out_final]


def init_snn_params(key, in_channels, hidden_channels, n_layers,
                    conv_order_down=1, conv_order_up=1):
    """Xavier-uniform init mirroring the torch module's layer plan.

    Each weight has the torch layout (C_in, C_out, K), K = 1 + conv_order_down + conv_order_up.
    """
    k_terms = 1 + conv_order_down + conv_order_up
    plan = [(in_channels, hidden_channels, None)]
    for i in range(n_layers - 1):
        if i == n_layers - 2:
            plan.append((hidden_channels, 1, "id"))
        else:
            plan.append((hidden_channels, hidden_channels, "relu"))

    params = []
    for cin, cout, upd in plan:
        key, sub = jax.random.split(key)
        bound = (6.0 / (cin + cout)) ** 0.5
        w = jax.random.uniform(sub, (cin, cout, k_terms), jnp.float32, -bound, bound)
        params.append({"weight": w, "update_func": upd})
    return params


def _snn_forward_ref(params, x, lap_down, lap_up, *, conv_order_down=1, conv_order_up=1):
    """Full-precision (f32) reference with the original torch association order."""
    for p in params:
        w = p["weight"]                      # (C_in, C_out, K)
        y = x @ w[:, :, 0]
        k = 1
        xt = x
        for _ in range(conv_order_down):
            xt = lap_down @ xt
            y = y + xt @ w[:, :, k]
            k += 1
        xt = x
        for _ in range(conv_order_up):
            xt = lap_up @ xt
            y = y + xt @ w[:, :, k]
            k += 1
        if p["update_func"] == "relu":
            y = jnp.maximum(y, 0.0)
        x = y
    return x


def _snn_forward_mirror_bf16(params, x, lap_down, lap_up):
    """Pure-JAX mirror of the kernel math (bf16 operands, f32 accum, reassociated fused form)."""
    bf = jnp.bfloat16
    lcat = jnp.concatenate([lap_down, lap_up], axis=1).astype(bf)
    act = x.astype(bf)
    y = None
    for p in params:
        w = p["weight"].astype(bf)
        y = jnp.dot(act, w[:, :, 0], preferred_element_type=jnp.float32)
        zd = jnp.dot(act, w[:, :, 1], preferred_element_type=jnp.float32).astype(bf)
        zu = jnp.dot(act, w[:, :, 2], preferred_element_type=jnp.float32).astype(bf)
        z = jnp.concatenate([zd, zu], axis=0)
        y = y + jnp.dot(lcat, z, preferred_element_type=jnp.float32)
        if p["update_func"] == "relu":
            y = jnp.maximum(y, 0.0)
        act = y.astype(bf)
    return y


if __name__ == "__main__":
    key = jax.random.PRNGKey(0)
    n_simplices = 16
    in_channels = 4
    hidden_channels = 32
    n_layers = 3                 # exercises the hidden 'relu' layer and the final 'id' layer
    cd = cu = 1

    k_x, k_d, k_u, k_p = jax.random.split(key, 4)
    x = jax.random.normal(k_x, (n_simplices, in_channels), jnp.float32)
    # Dense symmetric PSD stand-ins for the (normally sparse) Hodge Laplacians.
    bd = jax.random.normal(k_d, (n_simplices, n_simplices), jnp.float32) * 0.1
    bu = jax.random.normal(k_u, (n_simplices, n_simplices), jnp.float32) * 0.1
    lap_down = bd @ bd.T
    lap_up = bu @ bu.T

    params = init_snn_params(k_p, in_channels, hidden_channels, n_layers, cd, cu)
    weights = [p["weight"] for p in params]
    updates = tuple(p["update_func"] for p in params)

    @jax.jit
    def fwd(ws, xx, ld, lu):
        prm = [{"weight": w, "update_func": u} for w, u in zip(ws, updates)]
        return snn_forward(prm, xx, ld, lu, conv_order_down=cd, conv_order_up=cu)

    out = jax.block_until_ready(fwd(weights, x, lap_down, lap_up))
    assert out.shape == (n_simplices, 1)

    # Tight check against a pure-JAX mirror of the kernel math (same bf16/f32 rounding).
    mirror = _snn_forward_mirror_bf16(params, x, lap_down, lap_up)
    # Loose check against the original full-precision (f32) semantics.
    ref32 = _snn_forward_ref(params, x, lap_down, lap_up,
                             conv_order_down=cd, conv_order_up=cu)

    assert jnp.allclose(out, mirror, atol=1e-3, rtol=1e-3), \
        f"kernel vs bf16 mirror mismatch: {float(jnp.max(jnp.abs(out - mirror)))}"
    assert jnp.allclose(out, ref32, atol=5e-2, rtol=5e-2), \
        f"kernel vs f32 reference mismatch: {float(jnp.max(jnp.abs(out - ref32)))}"

    print("KERNEL_OK")
</pallas_src>

<mosaic_0001>
module attributes {stable_mosaic.version = 11 : i64} {
  func.func @_snn_fused_kernel(%arg0: i32, %arg1: memref<3xi32, #tpu.memory_space<smem>>, %arg2: memref<128x128xbf16, #tpu.memory_space<vmem>>, %arg3: memref<128x256xbf16, #tpu.memory_space<vmem>>, %arg4: memref<1x128x384xbf16, #tpu.memory_space<vmem>>, %arg5: memref<128x128xf32, #tpu.memory_space<vmem>>, %arg6: memref<128x128xbf16, #tpu.memory_space<vmem>>, %arg7: memref<256x128xbf16, #tpu.memory_space<vmem>>) attributes {dimension_semantics = [#tpu.dimension_semantics<arbitrary>], iteration_bounds = array<i64: 3>, scalar_prefetch = 1 : i64, scratch_operands = 2 : i64, tpu.core_type = #tpu.core_type<tc>, window_params = [{pipeline_mode = #tpu.pipeline_mode<synchronous>, transform_indices = @transform_0, window_bounds = array<i64: 128, 128>}, {pipeline_mode = #tpu.pipeline_mode<synchronous>, transform_indices = @transform_1, window_bounds = array<i64: 128, 256>}, {transform_indices = @transform_2, window_bounds = array<i64: 1, 128, 384>}, {pipeline_mode = #tpu.pipeline_mode<synchronous>, transform_indices = @transform_3, window_bounds = array<i64: 128, 128>}]} {
    %c0_i32 = arith.constant 0 : i32
    %0 = arith.cmpi eq, %arg0, %c0_i32 : i32
    %1 = arith.extui %0 : i1 to i32
    %c0_i32_0 = arith.constant 0 : i32
    %2 = arith.cmpi ne, %1, %c0_i32_0 : i32
    scf.if %2 {
      %c0_15 = arith.constant 0 : index
      %c0_16 = arith.constant 0 : index
      %27 = vector.load %arg2[%c0_15, %c0_16] : memref<128x128xbf16, #tpu.memory_space<vmem>>, vector<128x128xbf16>
      %c0_17 = arith.constant 0 : index
      %c0_18 = arith.constant 0 : index
      %28 = vector.load %arg6[%c0_17, %c0_18] : memref<128x128xbf16, #tpu.memory_space<vmem>>, vector<128x128xbf16>
      tpu.vector_store %arg6[%c0_17, %c0_18], %27 {strides = array<i32>} : memref<128x128xbf16, #tpu.memory_space<vmem>>, vector<128x128xbf16>,
    } else {
    }
    %c0 = arith.constant 0 : index
    %c0_1 = arith.constant 0 : index
    %3 = vector.load %arg6[%c0, %c0_1] : memref<128x128xbf16, #tpu.memory_space<vmem>>, vector<128x128xbf16>
    %c0_2 = arith.constant 0 : index
    %c0_3 = arith.constant 0 : index
    %c0_4 = arith.constant 0 : index
    %4 = vector.load %arg4[%c0_2, %c0_3, %c0_4] : memref<1x128x384xbf16, #tpu.memory_space<vmem>>, vector<1x128x384xbf16>
    %5 = vector.shape_cast %4 : vector<1x128x384xbf16> to vector<128x384xbf16>
    %cst = arith.constant dense<0.000000e+00> : vector<128x384xf32>
    %6 = tpu.matmul %3, %5, %cst {dimension_numbers = #tpu.dot_dimension_numbers<[1], [0], [0], [1], [0, 0, 1, 1], [], []>} : vector<128x128xbf16>, vector<128x384xbf16>, vector<128x384xf32> -> vector<128x384xf32>
    %7 = vector.extract_strided_slice %6 {offsets = [0, 0], sizes = [128, 128], strides = [1, 1]} : vector<128x384xf32> to vector<128x128xf32>
    %8 = vector.extract_strided_slice %6 {offsets = [0, 128], sizes = [128, 128], strides = [1, 1]} : vector<128x384xf32> to vector<128x128xf32>
    %9 = arith.truncf %8 : vector<128x128xf32> to vector<128x128xbf16>
    %c0_5 = arith.constant 0 : index
    %c0_6 = arith.constant 0 : index
    %10 = vector.load %arg7[%c0_5, %c0_6] : memref<256x128xbf16, #tpu.memory_space<vmem>>, vector<128x128xbf16>
    tpu.vector_store %arg7[%c0_5, %c0_6], %9 {strides = array<i32>} : memref<256x128xbf16, #tpu.memory_space<vmem>>, vector<128x128xbf16>,
    %11 = vector.extract_strided_slice %6 {offsets = [0, 256], sizes = [128, 128], strides = [1, 1]} : vector<128x384xf32> to vector<128x128xf32>
    %12 = arith.truncf %11 : vector<128x128xf32> to vector<128x128xbf16>
    %c128 = arith.constant 128 : index
    %c0_7 = arith.constant 0 : index
    %13 = vector.load %arg7[%c128, %c0_7] : memref<256x128xbf16, #tpu.memory_space<vmem>>, vector<128x128xbf16>
    tpu.vector_store %arg7[%c128, %c0_7], %12 {strides = array<i32>} : memref<256x128xbf16, #tpu.memory_space<vmem>>, vector<128x128xbf16>,
    %c0_8 = arith.constant 0 : index
    %c0_9 = arith.constant 0 : index
    %14 = vector.load %arg3[%c0_8, %c0_9] : memref<128x256xbf16, #tpu.memory_space<vmem>>, vector<128x256xbf16>
    %c0_10 = arith.constant 0 : index
    %c0_11 = arith.constant 0 : index
    %15 = vector.load %arg7[%c0_10, %c0_11] : memref<256x128xbf16, #tpu.memory_space<vmem>>, vector<256x128xbf16>
    %cst_12 = arith.constant dense<0.000000e+00> : vector<128x128xf32>
    %16 = tpu.matmul %14, %15, %cst_12 {dimension_numbers = #tpu.dot_dimension_numbers<[1], [0], [0], [1], [0, 0, 1, 1], [], []>} : vector<128x256xbf16>, vector<256x128xbf16>, vector<128x128xf32> -> vector<128x128xf32>
    %17 = arith.addf %7, %16 : vector<128x128xf32>
    %18 = arith.index_cast %arg0 : i32 to index
    %19 = memref.load %arg1[%18] : memref<3xi32, #tpu.memory_space<smem>>
    %c1_i32 = arith.constant 1 : i32
    %20 = arith.cmpi eq, %19, %c1_i32 : i32
    %c2_i32 = arith.constant 2 : i32
    %21 = arith.cmpi eq, %arg0, %c2_i32 : i32
    %true = arith.constant true
    %22 = arith.xori %21, %true : i1
    %23 = arith.extui %22 : i1 to i32
    %c0_i32_13 = arith.constant 0 : i32
    %24 = arith.cmpi ne, %23, %c0_i32_13 : i32
    scf.if %24 {
      %27 = arith.extui %20 : i1 to i32
      %c0_i32_15 = arith.constant 0 : i32
      %28 = arith.cmpi ne, %27, %c0_i32_15 : i32
      scf.if %28 {
        %cst_18 = arith.constant 0.000000e+00 : f32
        %32 = vector.broadcast %cst_18 : f32 to vector<128x128xf32>
        %33 = arith.maximumf %17, %32 : vector<128x128xf32>
        %34 = arith.truncf %33 : vector<128x128xf32> to vector<128x128xbf16>
        %c0_19 = arith.constant 0 : index
        %c0_20 = arith.constant 0 : index
        %35 = vector.load %arg6[%c0_19, %c0_20] : memref<128x128xbf16, #tpu.memory_space<vmem>>, vector<128x128xbf16>
        tpu.vector_store %arg6[%c0_19, %c0_20], %34 {strides = array<i32>} : memref<128x128xbf16, #tpu.memory_space<vmem>>, vector<128x128xbf16>,
      } else {
      }
      %true_16 = arith.constant true
      %29 = arith.xori %20, %true_16 : i1
      %30 = arith.extui %29 : i1 to i32
      %c0_i32_17 = arith.constant 0 : i32
      %31 = arith.cmpi ne, %30, %c0_i32_17 : i32
      scf.if %31 {
        %32 = arith.truncf %17 : vector<128x128xf32> to vector<128x128xbf16>
        %c0_18 = arith.constant 0 : index
        %c0_19 = arith.constant 0 : index
        %33 = vector.load %arg6[%c0_18, %c0_19] : memref<128x128xbf16, #tpu.memory_space<vmem>>, vector<128x128xbf16>
        tpu.vector_store %arg6[%c0_18, %c0_19], %32 {strides = array<i32>} : memref<128x128xbf16, #tpu.memory_space<vmem>>, vector<128x128xbf16>,
      } else {
      }
    } else {
    }
    %25 = arith.extui %21 : i1 to i32
    %c0_i32_14 = arith.constant 0 : i32
    %26 = arith.cmpi ne, %25, %c0_i32_14 : i32
    scf.if %26 {
      %27 = arith.extui %20 : i1 to i32
      %c0_i32_15 = arith.constant 0 : i32
      %28 = arith.cmpi ne, %27, %c0_i32_15 : i32
      scf.if %28 {
        %cst_18 = arith.constant 0.000000e+00 : f32
        %32 = vector.broadcast %cst_18 : f32 to vector<128x128xf32>
        %33 = arith.maximumf %17, %32 : vector<128x128xf32>
        %c0_19 = arith.constant 0 : index
        %c0_20 = arith.constant 0 : index
        %34 = vector.load %arg5[%c0_19, %c0_20] : memref<128x128xf32, #tpu.memory_space<vmem>>, vector<128x128xf32>
        tpu.vector_store %arg5[%c0_19, %c0_20], %33 {strides = array<i32>} : memref<128x128xf32, #tpu.memory_space<vmem>>, vector<128x128xf32>,
      } else {
      }
      %true_16 = arith.constant true
      %29 = arith.xori %20, %true_16 : i1
      %30 = arith.extui %29 : i1 to i32
      %c0_i32_17 = arith.constant 0 : i32
      %31 = arith.cmpi ne, %30, %c0_i32_17 : i32
      scf.if %31 {
        %c0_18 = arith.constant 0 : index
        %c0_19 = arith.constant 0 : index
        %32 = vector.load %arg5[%c0_18, %c0_19] : memref<128x128xf32, #tpu.memory_space<vmem>>, vector<128x128xf32>
        tpu.vector_store %arg5[%c0_18, %c0_19], %17 {strides = array<i32>} : memref<128x128xf32, #tpu.memory_space<vmem>>, vector<128x128xf32>,
      } else {
      }
    } else {
    }
    return
  }
  func.func @transform_0(%arg0: i32, %arg1: memref<3xi32, #tpu.memory_space<smem>>) -> (i32, i32) {
    %c0_i32 = arith.constant 0 : i32
    %c0_i32_0 = arith.constant 0 : i32
    %c0_i32_1 = arith.constant 0 : i32
    return %c0_i32, %c0_i32_0 : i32, i32
  }
  func.func @transform_1(%arg0: i32, %arg1: memref<3xi32, #tpu.memory_space<smem>>) -> (i32, i32) {
    %c0_i32 = arith.constant 0 : i32
    %c0_i32_0 = arith.constant 0 : i32
    %c0_i32_1 = arith.constant 0 : i32
    return %c0_i32, %c0_i32_0 : i32, i32
  }
  func.func @transform_2(%arg0: i32, %arg1: memref<3xi32, #tpu.memory_space<smem>>) -> (i32, i32, i32) {
    %c0_i32 = arith.constant 0 : i32
    %c0_i32_0 = arith.constant 0 : i32
    %c0_i32_1 = arith.constant 0 : i32
    return %arg0, %c0_i32, %c0_i32_0 : i32, i32, i32
  }
  func.func @transform_3(%arg0: i32, %arg1: memref<3xi32, #tpu.memory_space<smem>>) -> (i32, i32) {
    %c0_i32 = arith.constant 0 : i32
    %c0_i32_0 = arith.constant 0 : i32
    %c0_i32_1 = arith.constant 0 : i32
    return %c0_i32, %c0_i32_0 : i32, i32
  }
}

</mosaic_0001>

<llo_original>
// kernel: fwd.1
$region0: #{fwd.1}
  #allocation0 [shape = 'u32[]', space=smem, size = 0x4, offset = 0x4, fixed_abs, tag = 'smem constant byte address 0x4 - core index']
  #allocation1 [shape = 'u32[144,128]{1,0:T(1,128)}', space=vmem, size = 0x12000, scoped, tag = 'internal scratch']
  #allocation2 [shape = 'bf16[128,128]{1,0:T(16,128)(2,1)}', space=vmem, size = 0x8000, scoped, tag = 'scratch operand']
  #allocation3 [shape = 'bf16[256,128]{1,0:T(16,128)(2,1)}', space=vmem, size = 0x10000, scoped, tag = 'scratch operand']
  #allocation4 [shape = 's32[1]{0}', space=sflag, size = 0x4, scoped, tag = 'scoped memory for fwd.1']
  #allocation5 [shape = 'u8[512]{0}', space=smem, size = 0x200, scoped, tag = 'prefetched SMEM operand 0']
  %s0 = inlined_call_operand.vmem [shape: s32[3], index: 0, kind: input, shape index: {}]
  %s1 = inlined_call_operand.vmem [shape: bf16[128,128], index: 1, kind: input, shape index: {}]
  %s2 = inlined_call_operand.vmem [shape: bf16[128,256], index: 2, kind: input, shape index: {}]
  %s3 = inlined_call_operand.vmem [shape: bf16[3,128,384], index: 3, kind: input, shape index: {}]
  %s4 = inlined_call_operand.vmem [shape: f32[128,128], index: 4, kind: output, shape index: {}]
  %s5 = sld [smem:[#allocation0]]
  $region73: #{fwd.1} parent=0
    _
  %s7 = ssub.s32 1, %s5
  %s8 = scalar_select 0, %s7, %s5
  %s9 = sshll.u32 %s0, 4
  %s10 = int_to_ptr.vmem [resolvable:$true] %s9
  %12 = dma.vmem_to_smem %s10, 16, [#allocation5], [#allocation4]
  %13 = dma.done [#allocation4], 16
  %14 = sfence
  loop: start=0, step=1, limit=5
  $region2: #{fwd.1} parent=0 // loop_pre_header
    _
  $region3: #{fwd.1} parent=0 // loop_header
    %s16 = sphi 0, %s20
    %p17 = scmp.ge.s32.totalorder %s16, 5
    %s24 = sphi 0, %s24
    %s26 = sphi 0, %s24
    %s27 = sphi 0, %s26
    %s41 = sphi 0, %s27
    %s45 = sphi 0, %s45
    %s47 = sphi 0, %s45
    %s48 = sphi 0, %s47
    %s62 = sphi 0, %s48
    %s68 = sphi 0, %s70
    %s71 = sphi 0, %s68
    %s72 = sphi 0, %s71
    %s88 = sphi 0, %s72
    %s92 = sphi 0, %s92
    %s94 = sphi 0, %s92
    %s95 = sphi 0, %s94
    %s109 = sphi 0, %s95
  $region4: #{fwd.1} parent=0 // loop_header_branch
    %19 = sbr.rel (%p17) target = $region8
  $region5: #{fwd.1} parent=0 // loop_body
    %s21 = ssub.s32 %s16, 1
    %s22 = ssub.s32 %s16, 2
    %s23 = sadd.s32 %s16, 1
    %s25 = sadd.s32 %s24, 1
    %p28 = scmp.eq.s32.totalorder %s16, 2
    %p29 = scmp.ne.s32.totalorder %s24, %s26
    %p30 = scmp.eq.s32.totalorder %s16, 0
    %p31 = por %p29, %p30
    %p32 = scmp.ne.s32.totalorder %s24, %s26
    %p33 = scmp.eq.s32.totalorder %s21, 2
    %p34 = por %p32, %p33
    %p35 = scmp.ne.s32.totalorder %s26, %s27
    %p36 = scmp.eq.s32.totalorder %s21, 0
    %p37 = por %p35, %p36
    %p38 = scmp.ne.s32.totalorder %s26, %s27
    %p39 = scmp.eq.s32.totalorder %s22, 2
    %p40 = por %p38, %p39
    %p42 = scmp.ne.s32.totalorder %s27, %s41
    %p43 = scmp.eq.s32.totalorder %s22, 0
    %p44 = por %p42, %p43
    %s46 = sadd.s32 %s45, 1
    %p49 = scmp.eq.s32.totalorder %s16, 2
    %p50 = scmp.ne.s32.totalorder %s45, %s47
    %p51 = scmp.eq.s32.totalorder %s16, 0
    %p52 = por %p50, %p51
    %p53 = scmp.ne.s32.totalorder %s45, %s47
    %p54 = scmp.eq.s32.totalorder %s21, 2
    %p55 = por %p53, %p54
    %p56 = scmp.ne.s32.totalorder %s47, %s48
    %p57 = scmp.eq.s32.totalorder %s21, 0
    %p58 = por %p56, %p57
    %p59 = scmp.ne.s32.totalorder %s47, %s48
    %p60 = scmp.eq.s32.totalorder %s22, 2
    %p61 = por %p59, %p60
    %p63 = scmp.ne.s32.totalorder %s48, %s62
    %p64 = scmp.eq.s32.totalorder %s22, 0
    %p65 = por %p63, %p64
    %s66 = ssub.s32 %s16, %s23
    %p67 = scmp.eq.s32.totalorder %s66, 0
    %s69 = sadd.s32 %s68, 1
    %s70 = scalar_select %p67, %s68, %s69
    %p73 = pneg %p67
    %p74 = scmp.eq.s32.totalorder %s16, 2
    %p75 = por %p73, %p74
    %p76 = scmp.ne.s32.totalorder %s68, %s71
    %p77 = scmp.eq.s32.totalorder %s16, 0
    %p78 = por %p76, %p77
    %p79 = scmp.ne.s32.totalorder %s68, %s71
    %p80 = scmp.eq.s32.totalorder %s21, 2
    %p81 = por %p79, %p80
    %p82 = scmp.ne.s32.totalorder %s71, %s72
    %p83 = scmp.eq.s32.totalorder %s21, 0
    %p84 = por %p82, %p83
    %p85 = scmp.ne.s32.totalorder %s71, %s72
    %p86 = scmp.eq.s32.totalorder %s22, 2
    %p87 = por %p85, %p86
    %p89 = scmp.ne.s32.totalorder %s72, %s88
    %p90 = scmp.eq.s32.totalorder %s22, 0
    %p91 = por %p89, %p90
    %s93 = sadd.s32 %s92, 1
    %p96 = scmp.eq.s32.totalorder %s16, 2
    %p97 = scmp.ne.s32.totalorder %s92, %s94
    %p98 = scmp.eq.s32.totalorder %s16, 0
    %p99 = por %p97, %p98
    %p100 = scmp.ne.s32.totalorder %s92, %s94
    %p101 = scmp.eq.s32.totalorder %s21, 2
    %p102 = por %p100, %p101
    %p103 = scmp.ne.s32.totalorder %s94, %s95
    %p104 = scmp.eq.s32.totalorder %s21, 0
    %p105 = por %p103, %p104
    %p106 = scmp.ne.s32.totalorder %s94, %s95
    %p107 = scmp.eq.s32.totalorder %s22, 2
    %p108 = por %p106, %p107
    %p110 = scmp.ne.s32.totalorder %s95, %s109
    %p111 = scmp.eq.s32.totalorder %s22, 0
    %p112 = por %p110, %p111
    %p113 = scmp.le.s32.totalorder 1, %s16
    %p114 = scmp.lt.s32.totalorder %s16, 4
    %p115 = pnand %p113, %p114
    %p116 = pneg %p115
    // Predicated region
    $region9: #{fwd.1} parent=5 // pred_check
      _
    $region10: #{fwd.1} parent=5 // pred_check_branch
      %118 = sbr.rel (%p115) target = $region12
    $region11: #{fwd.1} parent=5 // pred_region
      %s119 = ssub.s32 %s16, 1
      // Predicated region
      $region13: #{fwd.1} parent=11 // pred_check
        %p120 = pneg %p37
      $region14: #{fwd.1} parent=11 // pred_check_branch
        %122 = sbr.rel (%p120) target = $region16
      $region15: #{fwd.1} parent=11 // pred_region
        _
      $region16: #{fwd.1} parent=11 // pred_fallthru
        _
      // Predicated region
      $region17: #{fwd.1} parent=11 // pred_check
        %p123 = pneg %p58
      $region18: #{fwd.1} parent=11 // pred_check_branch
        %125 = sbr.rel (%p123) target = $region20
      $region19: #{fwd.1} parent=11 // pred_region
        _
      $region20: #{fwd.1} parent=11 // pred_fallthru
        _
    $region12: #{fwd.1} parent=5 // pred_fallthru
      _
    %p126 = scmp.lt.s32.totalorder %s16, 3
    // Predicated region
    $region21: #{fwd.1} parent=5 // pred_check
      %p127 = pneg %p126
    $region22: #{fwd.1} parent=5 // pred_check_branch
      %129 = sbr.rel (%p127) target = $region24
    $region23: #{fwd.1} parent=5 // pred_region
      // Predicated region
      $region25: #{fwd.1} parent=23 // pred_check
        %p130 = pneg %p78
      $region26: #{fwd.1} parent=23 // pred_check_branch
        %132 = sbr.rel (%p130) target = $region28
      $region27: #{fwd.1} parent=23 // pred_region
        %p133 = scmp.lt.s32.totalorder %s16, 2
        %s134 = scalar_select %p133, %s16, 2
        %s135 = smul.addr %s134, 48
        %s136 = smul.addr %s135, 4
        %s137 = scalar_lea.vmem %s3, %s136
      $region28: #{fwd.1} parent=23 // pred_fallthru
        _
    $region24: #{fwd.1} parent=5 // pred_fallthru
      _
    %p138 = scmp.le.s32.totalorder 1, %s16
    %p139 = scmp.lt.s32.totalorder %s16, 4
    %p140 = pnand %p138, %p139
    %p141 = pneg %p140
    // Predicated region
    $region29: #{fwd.1} parent=5 // pred_check
      _
    $region30: #{fwd.1} parent=5 // pred_check_branch
      %143 = sbr.rel (%p140) target = $region32
    $region31: #{fwd.1} parent=5 // pred_region
      %s144 = ssub.s32 %s16, 1
      %p145 = pneg %p37
      %p146 = pneg %p34
      %p147 = pneg %p58
      %p148 = pneg %p55
      %p149 = scmp.lt.s32.totalorder %s21, 2
      %s150 = scalar_select %p149, %s21, 2
      %s151 = smul.addr %s150, 48
      %s152 = smul.addr %s151, 4
      %s153 = scalar_lea.vmem %s3, %s152
      %p154 = pneg %p84
      %p155 = pneg %p81
      %p156 = pneg %p105
      %p157 = pneg %p102
      %p158 = scmp.lt.s32.totalorder %s21, 2
      %s159 = scalar_select %p158, %s21, 2
      %s160 = smul.addr %s159, 48
      %s161 = smul.addr %s160, 4
      %s162 = scalar_lea.vmem %s3, %s161
      %p164 = scmp.eq.s32.totalorder %s21, 0
      // Predicated region
      $region33: #{fwd.1} parent=31 // pred_check
        %p165 = pneg %p164
      $region34: #{fwd.1} parent=31 // pred_check_branch
        %167 = sbr.rel (%p165) target = $region36
      $region35: #{fwd.1} parent=31 // pred_region
        %v168 = vld [vmem:[%s1] sm:$0xf]
        %v169 = vld [vmem:[%s1 + $0x4] sm:$0xf]
        %v170 = vld [vmem:[%s1 + $0x8] sm:$0xf]
        %v171 = vld [vmem:[%s1 + $0xc] sm:$0xf]
        %v172 = vld [vmem:[%s1 + $0x10] sm:$0xf]
        %v173 = vld [vmem:[%s1 + $0x14] sm:$0xf]
        %v174 = vld [vmem:[%s1 + $0x18] sm:$0xf]
        %v175 = vld [vmem:[%s1 + $0x1c] sm:$0xf]
        %v176 = vld [vmem:[%s1 + $0x20] sm:$0xf]
        %v177 = vld [vmem:[%s1 + $0x24] sm:$0xf]
        %v178 = vld [vmem:[%s1 + $0x28] sm:$0xf]
        %v179 = vld [vmem:[%s1 + $0x2c] sm:$0xf]
        %v180 = vld [vmem:[%s1 + $0x30] sm:$0xf]
        %v181 = vld [vmem:[%s1 + $0x34] sm:$0xf]
        %v182 = vld [vmem:[%s1 + $0x38] sm:$0xf]
        %v183 = vld [vmem:[%s1 + $0x3c] sm:$0xf]
        %v200 = vunpack.c.l.b16 %v168
        %v201 = vunpack.c.l.b16 %v169
        %v202 = vunpack.c.l.b16 %v170
        %v203 = vunpack.c.l.b16 %v171
        %v204 = vunpack.c.l.b16 %v172
        %v205 = vunpack.c.l.b16 %v173
        %v206 = vunpack.c.l.b16 %v174
        %v207 = vunpack.c.l.b16 %v175
        %v208 = vunpack.c.l.b16 %v176
        %v209 = vunpack.c.l.b16 %v177
        %v210 = vunpack.c.l.b16 %v178
        %v211 = vunpack.c.l.b16 %v179
        %v212 = vunpack.c.l.b16 %v180
        %v213 = vunpack.c.l.b16 %v181
        %v214 = vunpack.c.l.b16 %v182
        %v215 = vunpack.c.l.b16 %v183
        %v216 = vpack.c.b16 %v201, %v200
        %v217 = vpack.c.b16 %v203, %v202
        %v218 = vpack.c.b16 %v205, %v204
        %v219 = vpack.c.b16 %v207, %v206
        %v220 = vpack.c.b16 %v209, %v208
        %v221 = vpack.c.b16 %v211, %v210
        %v222 = vpack.c.b16 %v213, %v212
        %v223 = vpack.c.b16 %v215, %v214
        %232 = vst [vmem:[#allocation2] sm:$0xff] %v216
        %233 = vst [vmem:[#allocation2 + $0x8] sm:$0xff] %v217
        %234 = vst [vmem:[#allocation2 + $0x10] sm:$0xff] %v218
        %235 = vst [vmem:[#allocation2 + $0x18] sm:$0xff] %v219
        %236 = vst [vmem:[#allocation2 + $0x20] sm:$0xff] %v220
        %237 = vst [vmem:[#allocation2 + $0x28] sm:$0xff] %v221
        %238 = vst [vmem:[#allocation2 + $0x30] sm:$0xff] %v222
        %239 = vst [vmem:[#allocation2 + $0x38] sm:$0xff] %v223
      $region36: #{fwd.1} parent=31 // pred_fallthru
        _
      %v240 = vld [vmem:[#allocation2] sm:$0xff]
      %v241 = vld [vmem:[#allocation2 + $0x8] sm:$0xff]
      %v242 = vld [vmem:[#allocation2 + $0x10] sm:$0xff]
      %v243 = vld [vmem:[#allocation2 + $0x18] sm:$0xff]
      %v244 = vld [vmem:[#allocation2 + $0x20] sm:$0xff]
      %v245 = vld [vmem:[#allocation2 + $0x28] sm:$0xff]
      %v246 = vld [vmem:[#allocation2 + $0x30] sm:$0xff]
      %v247 = vld [vmem:[#allocation2 + $0x38] sm:$0xff]
      %v248 = vld [vmem:[%s162] sm:$0xff]
      %v249 = vld [vmem:[%s162 + $0x8] sm:$0xf]
      %v250 = vld [vmem:[%s162 + $0xc] sm:$0xff]
      %v251 = vld [vmem:[%s162 + $0x14] sm:$0xf]
      %v252 = vld [vmem:[%s162 + $0x18] sm:$0xff]
      %v253 = vld [vmem:[%s162 + $0x20] sm:$0xf]
      %v254 = vld [vmem:[%s162 + $0x24] sm:$0xff]
      %v255 = vld [vmem:[%s162 + $0x2c] sm:$0xf]
      %v256 = vld [vmem:[%s162 + $0x30] sm:$0xff]
      %v257 = vld [vmem:[%s162 + $0x38] sm:$0xf]
      %v258 = vld [vmem:[%s162 + $0x3c] sm:$0xff]
      %v259 = vld [vmem:[%s162 + $0x44] sm:$0xf]
      %v260 = vld [vmem:[%s162 + $0x48] sm:$0xff]
      %v261 = vld [vmem:[%s162 + $0x50] sm:$0xf]
      %v262 = vld [vmem:[%s162 + $0x54] sm:$0xff]
      %v263 = vld [vmem:[%s162 + $0x5c] sm:$0xf]
      %v264 = vld [vmem:[%s162 + $0x60] sm:$0xff]
      %v265 = vld [vmem:[%s162 + $0x68] sm:$0xf]
      %v266 = vld [vmem:[%s162 + $0x6c] sm:$0xff]
      %v267 = vld [vmem:[%s162 + $0x74] sm:$0xf]
      %v268 = vld [vmem:[%s162 + $0x78] sm:$0xff]
      %v269 = vld [vmem:[%s162 + $0x80] sm:$0xf]
      %v270 = vld [vmem:[%s162 + $0x84] sm:$0xff]
      %v271 = vld [vmem:[%s162 + $0x8c] sm:$0xf]
      %v272 = vld [vmem:[%s162 + $0x90] sm:$0xff]
      %v273 = vld [vmem:[%s162 + $0x98] sm:$0xf]
      %v274 = vld [vmem:[%s162 + $0x9c] sm:$0xff]
      %v275 = vld [vmem:[%s162 + $0xa4] sm:$0xf]
      %v276 = vld [vmem:[%s162 + $0xa8] sm:$0xff]
      %v277 = vld [vmem:[%s162 + $0xb0] sm:$0xf]
      %v278 = vld [vmem:[%s162 + $0xb4] sm:$0xff]
      %v279 = vld [vmem:[%s162 + $0xbc] sm:$0xf]
      %v312 = vunpack.c.l.b16 %v248
      %v313 = vunpack.c.h.b16 %v248
      %v314 = vunpack.c.l.b16 %v249
      %v315 = vunpack.c.l.b16 %v250
      %v316 = vunpack.c.h.b16 %v250
      %v317 = vunpack.c.l.b16 %v251
      %v318 = vunpack.c.l.b16 %v252
      %v319 = vunpack.c.h.b16 %v252
      %v320 = vunpack.c.l.b16 %v253
      %v321 = vunpack.c.l.b16 %v254
      %v322 = vunpack.c.h.b16 %v254
      %v323 = vunpack.c.l.b16 %v255
      %v324 = vunpack.c.l.b16 %v256
      %v325 = vunpack.c.h.b16 %v256
      %v326 = vunpack.c.l.b16 %v257
      %v327 = vunpack.c.l.b16 %v258
      %v328 = vunpack.c.h.b16 %v258
      %v329 = vunpack.c.l.b16 %v259
      %v330 = vunpack.c.l.b16 %v260
      %v331 = vunpack.c.h.b16 %v260
      %v332 = vunpack.c.l.b16 %v261
      %v333 = vunpack.c.l.b16 %v262
      %v334 = vunpack.c.h.b16 %v262
      %v335 = vunpack.c.l.b16 %v263
      %v336 = vunpack.c.l.b16 %v264
      %v337 = vunpack.c.h.b16 %v264
      %v338 = vunpack.c.l.b16 %v265
      %v339 = vunpack.c.l.b16 %v266
      %v340 = vunpack.c.h.b16 %v266
      %v341 = vunpack.c.l.b16 %v267
      %v342 = vunpack.c.l.b16 %v268
      %v343 = vunpack.c.h.b16 %v268
      %v344 = vunpack.c.l.b16 %v269
      %v345 = vunpack.c.l.b16 %v270
      %v346 = vunpack.c.h.b16 %v270
      %v347 = vunpack.c.l.b16 %v271
      %v348 = vunpack.c.l.b16 %v272
      %v349 = vunpack.c.h.b16 %v272
      %v350 = vunpack.c.l.b16 %v273
      %v351 = vunpack.c.l.b16 %v274
      %v352 = vunpack.c.h.b16 %v274
      %v353 = vunpack.c.l.b16 %v275
      %v354 = vunpack.c.l.b16 %v276
      %v355 = vunpack.c.h.b16 %v276
      %v356 = vunpack.c.l.b16 %v277
      %v357 = vunpack.c.l.b16 %v278
      %v358 = vunpack.c.h.b16 %v278
      %v359 = vunpack.c.l.b16 %v279
      %v360 = vpack.c.b16 %v315, %v312
      %v361 = vpack.c.b16 %v316, %v313
      %v362 = vpack.c.b16 %v317, %v314
      %v363 = vpack.c.b16 %v321, %v318
      %v364 = vpack.c.b16 %v322, %v319
      %v365 = vpack.c.b16 %v323, %v320
      %v366 = vpack.c.b16 %v327, %v324
      %v367 = vpack.c.b16 %v328, %v325
      %v368 = vpack.c.b16 %v329, %v326
      %v369 = vpack.c.b16 %v333, %v330
      %v370 = vpack.c.b16 %v334, %v331
      %v371 = vpack.c.b16 %v335, %v332
      %v372 = vpack.c.b16 %v339, %v336
      %v373 = vpack.c.b16 %v340, %v337
      %v374 = vpack.c.b16 %v341, %v338
      %v375 = vpack.c.b16 %v345, %v342
      %v376 = vpack.c.b16 %v346, %v343
      %v377 = vpack.c.b16 %v347, %v344
      %v378 = vpack.c.b16 %v351, %v348
      %v379 = vpack.c.b16 %v352, %v349
      %v380 = vpack.c.b16 %v353, %v350
      %v381 = vpack.c.b16 %v357, %v354
      %v382 = vpack.c.b16 %v358, %v355
      %v383 = vpack.c.b16 %v359, %v356
      %408 = vmatprep.subr.bf16.mxu0 %v361
      %409 = vmatpush1.bf16.msra.mxu0 %v360
      %410 = vmatprep.subr.bf16.mxu0 %v364
      %411 = vmatpush1.bf16.msra.mxu0 %v363
      %412 = vmatprep.subr.bf16.mxu0 %v367
      %413 = vmatpush1.bf16.msra.mxu0 %v366
      %414 = vmatprep.subr.bf16.mxu0 %v370
      %415 = vmatpush1.bf16.msra.mxu0 %v369
      %416 = vmatprep.subr.bf16.mxu0 %v373
      %417 = vmatpush1.bf16.msra.mxu0 %v372
      %418 = vmatprep.subr.bf16.mxu0 %v376
      %419 = vmatpush1.bf16.msra.mxu0 %v375
      %420 = vmatprep.subr.bf16.mxu0 %v379
      %421 = vmatpush1.bf16.msra.mxu0 %v378
      %422 = vmatprep.subr.bf16.mxu0 %v382
      %423 = vmatpush1.bf16.msra.mxu0 %v381
      %424 = vmatprep.subr.bf16.mxu0 0
      %425 = vmatpush1.bf16.msra.mxu0 0
      %426 = vmatprep.subr.bf16.mxu0 0
      %427 = vmatpush1.bf16.msra.mxu0 0
      %428 = vmatprep.subr.bf16.mxu0 0
      %429 = vmatpush1.bf16.msra.mxu0 0
      %430 = vmatprep.subr.bf16.mxu0 0
      %431 = vmatpush1.bf16.msra.mxu0 0
      %432 = vmatprep.subr.bf16.mxu0 0
      %433 = vmatpush1.bf16.msra.mxu0 0
      %434 = vmatprep.subr.bf16.mxu0 0
      %435 = vmatpush1.bf16.msra.mxu0 0
      %436 = vmatprep.subr.bf16.mxu0 0
      %437 = vmatpush1.bf16.msra.mxu0 0
      %438 = vmatprep.subr.bf16.mxu0 0
      %439 = vmatpush1.bf16.msra.mxu0 0
      %440 = vmatprep.mubr.bf16.mxu0 0
      %441 = vmatmul.mubr.bf16.gmra.mrb[0].mxu0 %v240
      %v442 = vpop.f32.mrb[0].mxu0
      %v443 = vadd.f32 0.0, %v442
      %v444 = vpop.f32.mrb[0].mxu0
      %v445 = vadd.f32 0.0, %v444
      %v446 = vpop.f32.mrb[0].mxu0
      %v447 = vadd.f32 0.0, %v446
      %v448 = vpop.f32.mrb[0].mxu0
      %v449 = vadd.f32 0.0, %v448
      %450 = vmatprep.mubr.bf16.mxu0 0
      %451 = vmatmul.mubr.bf16.gmra.mrb[0].mxu0 %v241
      %v452 = vpop.f32.mrb[0].mxu0
      %v453 = vadd.f32 0.0, %v452
      %v454 = vpop.f32.mrb[0].mxu0
      %v455 = vadd.f32 0.0, %v454
      %v456 = vpop.f32.mrb[0].mxu0
      %v457 = vadd.f32 0.0, %v456
      %v458 = vpop.f32.mrb[0].mxu0
      %v459 = vadd.f32 0.0, %v458
      %460 = vmatprep.mubr.bf16.mxu0 0
      %461 = vmatmul.mubr.bf16.gmra.mrb[0].mxu0 %v242
      %v462 = vpop.f32.mrb[0].mxu0
      %v463 = vadd.f32 0.0, %v462
      %v464 = vpop.f32.mrb[0].mxu0
      %v465 = vadd.f32 0.0, %v464
      %v466 = vpop.f32.mrb[0].mxu0
      %v467 = vadd.f32 0.0, %v466
      %v468 = vpop.f32.mrb[0].mxu0
      %v469 = vadd.f32 0.0, %v468
      %470 = vmatprep.mubr.bf16.mxu0 0
      %471 = vmatmul.mubr.bf16.gmra.mrb[0].mxu0 %v243
      %v472 = vpop.f32.mrb[0].mxu0
      %v473 = vadd.f32 0.0, %v472
      %v474 = vpop.f32.mrb[0].mxu0
      %v475 = vadd.f32 0.0, %v474
      %v476 = vpop.f32.mrb[0].mxu0
      %v477 = vadd.f32 0.0, %v476
      %v478 = vpop.f32.mrb[0].mxu0
      %v479 = vadd.f32 0.0, %v478
      %480 = vmatprep.mubr.bf16.mxu0 0
      %481 = vmatmul.mubr.bf16.gmra.mrb[0].mxu0 %v244
      %v482 = vpop.f32.mrb[0].mxu0
      %v483 = vadd.f32 0.0, %v482
      %v484 = vpop.f32.mrb[0].mxu0
      %v485 = vadd.f32 0.0, %v484
      %v486 = vpop.f32.mrb[0].mxu0
      %v487 = vadd.f32 0.0, %v486
      %v488 = vpop.f32.mrb[0].mxu0
      %v489 = vadd.f32 0.0, %v488
      %490 = vmatprep.mubr.bf16.mxu0 0
      %491 = vmatmul.mubr.bf16.gmra.mrb[0].mxu0 %v245
      %v492 = vpop.f32.mrb[0].mxu0
      %v493 = vadd.f32 0.0, %v492
      %v494 = vpop.f32.mrb[0].mxu0
      %v495 = vadd.f32 0.0, %v494
      %v496 = vpop.f32.mrb[0].mxu0
      %v497 = vadd.f32 0.0, %v496
      %v498 = vpop.f32.mrb[0].mxu0
      %v499 = vadd.f32 0.0, %v498
      %500 = vmatprep.mubr.bf16.mxu0 0
      %501 = vmatmul.mubr.bf16.gmra.mrb[0].mxu0 %v246
      %v502 = vpop.f32.mrb[0].mxu0
      %v503 = vadd.f32 0.0, %v502
      %v504 = vpop.f32.mrb[0].mxu0
      %v505 = vadd.f32 0.0, %v504
      %v506 = vpop.f32.mrb[0].mxu0
      %v507 = vadd.f32 0.0, %v506
      %v508 = vpop.f32.mrb[0].mxu0
      %v509 = vadd.f32 0.0, %v508
      %510 = vmatprep.mubr.bf16.mxu0 0
      %511 = vmatmul.mubr.bf16.gmra.mrb[0].mxu0 %v247
      %v512 = vpop.f32.mrb[0].mxu0
      %v513 = vadd.f32 0.0, %v512
      %v514 = vpop.f32.mrb[0].mxu0
      %v515 = vadd.f32 0.0, %v514
      %v516 = vpop.f32.mrb[0].mxu0
      %v517 = vadd.f32 0.0, %v516
      %v518 = vpop.f32.mrb[0].mxu0
      %v519 = vadd.f32 0.0, %v518
      %520 = vdwg.mxu0
      %521 = vmatprep.subr.bf16.mxu0 0
      %522 = vmatpush1.bf16.msra.mxu0 %v362
      %523 = vmatprep.subr.bf16.mxu0 0
      %524 = vmatpush1.bf16.msra.mxu0 %v365
      %525 = vmatprep.subr.bf16.mxu0 0
      %526 = vmatpush1.bf16.msra.mxu0 %v368
      %527 = vmatprep.subr.bf16.mxu0 0
      %528 = vmatpush1.bf16.msra.mxu0 %v371
      %529 = vmatprep.subr.bf16.mxu0 0
      %530 = vmatpush1.bf16.msra.mxu0 %v374
      %531 = vmatprep.subr.bf16.mxu0 0
      %532 = vmatpush1.bf16.msra.mxu0 %v377
      %533 = vmatprep.subr.bf16.mxu0 0
      %534 = vmatpush1.bf16.msra.mxu0 %v380
      %535 = vmatprep.subr.bf16.mxu0 0
      %536 = vmatpush1.bf16.msra.mxu0 %v383
      %537 = vmatprep.subr.bf16.mxu0 0
      %538 = vmatpush1.bf16.msra.mxu0 0
      %539 = vmatprep.subr.bf16.mxu0 0
      %540 = vmatpush1.bf16.msra.mxu0 0
      %541 = vmatprep.subr.bf16.mxu0 0
      %542 = vmatpush1.bf16.msra.mxu0 0
      %543 = vmatprep.subr.bf16.mxu0 0
      %544 = vmatpush1.bf16.msra.mxu0 0
      %545 = vmatprep.subr.bf16.mxu0 0
      %546 = vmatpush1.bf16.msra.mxu0 0
      %547 = vmatprep.subr.bf16.mxu0 0
      %548 = vmatpush1.bf16.msra.mxu0 0
      %549 = vmatprep.subr.bf16.mxu0 0
      %550 = vmatpush1.bf16.msra.mxu0 0
      %551 = vmatprep.subr.bf16.mxu0 0
      %552 = vmatpush1.bf16.msra.mxu0 0
      %553 = vmatprep.mubr.bf16.mxu0 0
      %554 = vmatmul.mubr.bf16.gmra.mrb[0].mxu0 %v240
      %v555 = vpop.f32.mrb[0].mxu0
      %v556 = vadd.f32 0.0, %v555
      %v557 = vpop.f32.mrb[0].mxu0
      %v558 = vpop.f32.mrb[0].mxu0
      %v559 = vadd.f32 0.0, %v558
      %v560 = vpop.f32.mrb[0].mxu0
      %561 = vmatprep.mubr.bf16.mxu0 0
      %562 = vmatmul.mubr.bf16.gmra.mrb[0].mxu0 %v241
      %v563 = vpop.f32.mrb[0].mxu0
      %v564 = vadd.f32 0.0, %v563
      %v565 = vpop.f32.mrb[0].mxu0
      %v566 = vpop.f32.mrb[0].mxu0
      %v567 = vadd.f32 0.0, %v566
      %v568 = vpop.f32.mrb[0].mxu0
      %569 = vmatprep.mubr.bf16.mxu0 0
      %570 = vmatmul.mubr.bf16.gmra.mrb[0].mxu0 %v242
      %v571 = vpop.f32.mrb[0].mxu0
      %v572 = vadd.f32 0.0, %v571
      %v573 = vpop.f32.mrb[0].mxu0
      %v574 = vpop.f32.mrb[0].mxu0
      %v575 = vadd.f32 0.0, %v574
      %v576 = vpop.f32.mrb[0].mxu0
      %577 = vmatprep.mubr.bf16.mxu0 0
      %578 = vmatmul.mubr.bf16.gmra.mrb[0].mxu0 %v243
      %v579 = vpop.f32.mrb[0].mxu0
      %v580 = vadd.f32 0.0, %v579
      %v581 = vpop.f32.mrb[0].mxu0
      %v582 = vpop.f32.mrb[0].mxu0
      %v583 = vadd.f32 0.0, %v582
      %v584 = vpop.f32.mrb[0].mxu0
      %585 = vmatprep.mubr.bf16.mxu0 0
      %586 = vmatmul.mubr.bf16.gmra.mrb[0].mxu0 %v244
      %v587 = vpop.f32.mrb[0].mxu0
      %v588 = vadd.f32 0.0, %v587
      %v589 = vpop.f32.mrb[0].mxu0
      %v590 = vpop.f32.mrb[0].mxu0
      %v591 = vadd.f32 0.0, %v590
      %v592 = vpop.f32.mrb[0].mxu0
      %593 = vmatprep.mubr.bf16.mxu0 0
      %594 = vmatmul.mubr.bf16.gmra.mrb[0].mxu0 %v245
      %v595 = vpop.f32.mrb[0].mxu0
      %v596 = vadd.f32 0.0, %v595
      %v597 = vpop.f32.mrb[0].mxu0
      %v598 = vpop.f32.mrb[0].mxu0
      %v599 = vadd.f32 0.0, %v598
      %v600 = vpop.f32.mrb[0].mxu0
      %601 = vmatprep.mubr.bf16.mxu0 0
      %602 = vmatmul.mubr.bf16.gmra.mrb[0].mxu0 %v246
      %v603 = vpop.f32.mrb[0].mxu0
      %v604 = vadd.f32 0.0, %v603
      %v605 = vpop.f32.mrb[0].mxu0
      %v606 = vpop.f32.mrb[0].mxu0
      %v607 = vadd.f32 0.0, %v606
      %v608 = vpop.f32.mrb[0].mxu0
      %609 = vmatprep.mubr.bf16.mxu0 0
      %610 = vmatmul.mubr.bf16.gmra.mrb[0].mxu0 %v247
      %v611 = vpop.f32.mrb[0].mxu0
      %v612 = vadd.f32 0.0, %v611
      %v613 = vpop.f32.mrb[0].mxu0
      %v614 = vpop.f32.mrb[0].mxu0
      %v615 = vadd.f32 0.0, %v614
      %v616 = vpop.f32.mrb[0].mxu0
      %617 = vdwg.mxu0
      %v618 = vpack.c.bf16 %v449, %v445
      %v619 = vpack.c.bf16 %v459, %v455
      %v620 = vpack.c.bf16 %v469, %v465
      %v621 = vpack.c.bf16 %v479, %v475
      %v622 = vpack.c.bf16 %v489, %v485
      %v623 = vpack.c.bf16 %v499, %v495
      %v624 = vpack.c.bf16 %v509, %v505
      %v625 = vpack.c.bf16 %v519, %v515
      %626 = vst [vmem:[#allocation3] sm:$0xff] %v618
      %627 = vst [vmem:[#allocation3 + $0x8] sm:$0xff] %v619
      %628 = vst [vmem:[#allocation3 + $0x10] sm:$0xff] %v620
      %629 = vst [vmem:[#allocation3 + $0x18] sm:$0xff] %v621
      %630 = vst [vmem:[#allocation3 + $0x20] sm:$0xff] %v622
      %631 = vst [vmem:[#allocation3 + $0x28] sm:$0xff] %v623
      %632 = vst [vmem:[#allocation3 + $0x30] sm:$0xff] %v624
      %633 = vst [vmem:[#allocation3 + $0x38] sm:$0xff] %v625
      %v634 = vpack.c.bf16 %v559, %v556
      %v635 = vpack.c.bf16 %v567, %v564
      %v636 = vpack.c.bf16 %v575, %v572
      %v637 = vpack.c.bf16 %v583, %v580
      %v638 = vpack.c.bf16 %v591, %v588
      %v639 = vpack.c.bf16 %v599, %v596
      %v640 = vpack.c.bf16 %v607, %v604
      %v641 = vpack.c.bf16 %v615, %v612
      %642 = vst [vmem:[#allocation3 + $0x40] sm:$0xff] %v634
      %643 = vst [vmem:[#allocation3 + $0x48] sm:$0xff] %v635
      %644 = vst [vmem:[#allocation3 + $0x50] sm:$0xff] %v636
      %645 = vst [vmem:[#allocation3 + $0x58] sm:$0xff] %v637
      %646 = vst [vmem:[#allocation3 + $0x60] sm:$0xff] %v638
      %647 = vst [vmem:[#allocation3 + $0x68] sm:$0xff] %v639
      %648 = vst [vmem:[#allocation3 + $0x70] sm:$0xff] %v640
      %649 = vst [vmem:[#allocation3 + $0x78] sm:$0xff] %v641
      %v650 = vld [vmem:[%s2] sm:$0xff]
      %v651 = vld [vmem:[%s2 + $0x8] sm:$0xff]
      %v652 = vld [vmem:[%s2 + $0x10] sm:$0xff]
      %v653 = vld [vmem:[%s2 + $0x18] sm:$0xff]
      %v654 = vld [vmem:[%s2 + $0x20] sm:$0xff]
      %v655 = vld [vmem:[%s2 + $0x28] sm:$0xff]
      %v656 = vld [vmem:[%s2 + $0x30] sm:$0xff]
      %v657 = vld [vmem:[%s2 + $0x38] sm:$0xff]
      %v658 = vld [vmem:[%s2 + $0x40] sm:$0xff]
      %v659 = vld [vmem:[%s2 + $0x48] sm:$0xff]
      %v660 = vld [vmem:[%s2 + $0x50] sm:$0xff]
      %v661 = vld [vmem:[%s2 + $0x58] sm:$0xff]
      %v662 = vld [vmem:[%s2 + $0x60] sm:$0xff]
      %v663 = vld [vmem:[%s2 + $0x68] sm:$0xff]
      %v664 = vld [vmem:[%s2 + $0x70] sm:$0xff]
      %v665 = vld [vmem:[%s2 + $0x78] sm:$0xff]
      %v666 = vld [vmem:[#allocation3] sm:$0xff]
      %v667 = vld [vmem:[#allocation3 + $0x8] sm:$0xff]
      %v668 = vld [vmem:[#allocation3 + $0x10] sm:$0xff]
      %v669 = vld [vmem:[#allocation3 + $0x18] sm:$0xff]
      %v670 = vld [vmem:[#allocation3 + $0x20] sm:$0xff]
      %v671 = vld [vmem:[#allocation3 + $0x28] sm:$0xff]
      %v672 = vld [vmem:[#allocation3 + $0x30] sm:$0xff]
      %v673 = vld [vmem:[#allocation3 + $0x38] sm:$0xff]
      %v674 = vld [vmem:[#allocation3 + $0x40] sm:$0xff]
      %v675 = vld [vmem:[#allocation3 + $0x48] sm:$0xff]
      %v676 = vld [vmem:[#allocation3 + $0x50] sm:$0xff]
      %v677 = vld [vmem:[#allocation3 + $0x58] sm:$0xff]
      %v678 = vld [vmem:[#allocation3 + $0x60] sm:$0xff]
      %v679 = vld [vmem:[#allocation3 + $0x68] sm:$0xff]
      %v680 = vld [vmem:[#allocation3 + $0x70] sm:$0xff]
      %v681 = vld [vmem:[#allocation3 + $0x78] sm:$0xff]
      %v698 = vunpack.c.l.b16 %v650
      %v699 = vunpack.c.h.b16 %v650
      %v700 = vunpack.c.l.b16 %v651
      %v701 = vunpack.c.h.b16 %v651
      %v702 = vunpack.c.l.b16 %v652
      %v703 = vunpack.c.h.b16 %v652
      %v704 = vunpack.c.l.b16 %v653
      %v705 = vunpack.c.h.b16 %v653
      %v706 = vunpack.c.l.b16 %v654
      %v707 = vunpack.c.h.b16 %v654
      %v708 = vunpack.c.l.b16 %v655
      %v709 = vunpack.c.h.b16 %v655
      %v710 = vunpack.c.l.b16 %v656
      %v711 = vunpack.c.h.b16 %v656
      %v712 = vunpack.c.l.b16 %v657
      %v713 = vunpack.c.h.b16 %v657
      %v714 = vunpack.c.l.b16 %v658
      %v715 = vunpack.c.h.b16 %v658
      %v716 = vunpack.c.l.b16 %v659
      %v717 = vunpack.c.h.b16 %v659
      %v718 = vunpack.c.l.b16 %v660
      %v719 = vunpack.c.h.b16 %v660
      %v720 = vunpack.c.l.b16 %v661
      %v721 = vunpack.c.h.b16 %v661
      %v722 = vunpack.c.l.b16 %v662
      %v723 = vunpack.c.h.b16 %v662
      %v724 = vunpack.c.l.b16 %v663
      %v725 = vunpack.c.h.b16 %v663
      %v726 = vunpack.c.l.b16 %v664
      %v727 = vunpack.c.h.b16 %v664
      %v728 = vunpack.c.l.b16 %v665
      %v729 = vunpack.c.h.b16 %v665
      %v730 = vpack.c.b16 %v700, %v698
      %v731 = vpack.c.b16 %v701, %v699
      %v732 = vpack.c.b16 %v704, %v702
      %v733 = vpack.c.b16 %v705, %v703
      %v734 = vpack.c.b16 %v708, %v706
      %v735 = vpack.c.b16 %v709, %v707
      %v736 = vpack.c.b16 %v712, %v710
      %v737 = vpack.c.b16 %v713, %v711
      %v738 = vpack.c.b16 %v716, %v714
      %v739 = vpack.c.b16 %v717, %v715
      %v740 = vpack.c.b16 %v720, %v718
      %v741 = vpack.c.b16 %v721, %v719
      %v742 = vpack.c.b16 %v724, %v722
      %v743 = vpack.c.b16 %v725, %v723
      %v744 = vpack.c.b16 %v728, %v726
      %v745 = vpack.c.b16 %v729, %v727
      %762 = vmatprep.subr.bf16.mxu0 0
      %763 = vmatpush1.bf16.msra.mxu0 %v666
      %764 = vmatprep.subr.bf16.mxu0 0
      %765 = vmatpush1.bf16.msra.mxu0 %v667
      %766 = vmatprep.subr.bf16.mxu0 0
      %767 = vmatpush1.bf16.msra.mxu0 %v668
      %768 = vmatprep.subr.bf16.mxu0 0
      %769 = vmatpush1.bf16.msra.mxu0 %v669
      %770 = vmatprep.subr.bf16.mxu0 0
      %771 = vmatpush1.bf16.msra.mxu0 %v670
      %772 = vmatprep.subr.bf16.mxu0 0
      %773 = vmatpush1.bf16.msra.mxu0 %v671
      %774 = vmatprep.subr.bf16.mxu0 0
      %775 = vmatpush1.bf16.msra.mxu0 %v672
      %776 = vmatprep.subr.bf16.mxu0 0
      %777 = vmatpush1.bf16.msra.mxu0 %v673
      %778 = vmatprep.subr.bf16.mxu0 0
      %779 = vmatpush1.bf16.msra.mxu0 %v674
      %780 = vmatprep.subr.bf16.mxu0 0
      %781 = vmatpush1.bf16.msra.mxu0 %v675
      %782 = vmatprep.subr.bf16.mxu0 0
      %783 = vmatpush1.bf16.msra.mxu0 %v676
      %784 = vmatprep.subr.bf16.mxu0 0
      %785 = vmatpush1.bf16.msra.mxu0 %v677
      %786 = vmatprep.subr.bf16.mxu0 0
      %787 = vmatpush1.bf16.msra.mxu0 %v678
      %788 = vmatprep.subr.bf16.mxu0 0
      %789 = vmatpush1.bf16.msra.mxu0 %v679
      %790 = vmatprep.subr.bf16.mxu0 0
      %791 = vmatpush1.bf16.msra.mxu0 %v680
      %792 = vmatprep.subr.bf16.mxu0 0
      %793 = vmatpush1.bf16.msra.mxu0 %v681
      %794 = vmatprep.mubr.bf16.mxu0 %v731
      %795 = vmatmul.mubr.bf16.gmra.mrb[0].mxu0 %v730
      %v796 = vpop.f32.mrb[0].mxu0
      %v797 = vadd.f32 0.0, %v796
      %v798 = vpop.f32.mrb[0].mxu0
      %v799 = vpop.f32.mrb[0].mxu0
      %v800 = vadd.f32 0.0, %v799
      %v801 = vpop.f32.mrb[0].mxu0
      %802 = vmatprep.mubr.bf16.mxu0 %v733
      %803 = vmatmul.mubr.bf16.gmra.mrb[0].mxu0 %v732
      %v804 = vpop.f32.mrb[0].mxu0
      %v805 = vadd.f32 0.0, %v804
      %v806 = vpop.f32.mrb[0].mxu0
      %v807 = vpop.f32.mrb[0].mxu0
      %v808 = vadd.f32 0.0, %v807
      %v809 = vpop.f32.mrb[0].mxu0
      %810 = vmatprep.mubr.bf16.mxu0 %v735
      %811 = vmatmul.mubr.bf16.gmra.mrb[0].mxu0 %v734
      %v812 = vpop.f32.mrb[0].mxu0
      %v813 = vadd.f32 0.0, %v812
      %v814 = vpop.f32.mrb[0].mxu0
      %v815 = vpop.f32.mrb[0].mxu0
      %v816 = vadd.f32 0.0, %v815
      %v817 = vpop.f32.mrb[0].mxu0
      %818 = vmatprep.mubr.bf16.mxu0 %v737
      %819 = vmatmul.mubr.bf16.gmra.mrb[0].mxu0 %v736
      %v820 = vpop.f32.mrb[0].mxu0
      %v821 = vadd.f32 0.0, %v820
      %v822 = vpop.f32.mrb[0].mxu0
      %v823 = vpop.f32.mrb[0].mxu0
      %v824 = vadd.f32 0.0, %v823
      %v825 = vpop.f32.mrb[0].mxu0
      %826 = vmatprep.mubr.bf16.mxu0 %v739
      %827 = vmatmul.mubr.bf16.gmra.mrb[0].mxu0 %v738
      %v828 = vpop.f32.mrb[0].mxu0
      %v829 = vadd.f32 0.0, %v828
      %v830 = vpop.f32.mrb[0].mxu0
      %v831 = vpop.f32.mrb[0].mxu0
      %v832 = vadd.f32 0.0, %v831
      %v833 = vpop.f32.mrb[0].mxu0
      %834 = vmatprep.mubr.bf16.mxu0 %v741
      %835 = vmatmul.mubr.bf16.gmra.mrb[0].mxu0 %v740
      %v836 = vpop.f32.mrb[0].mxu0
      %v837 = vadd.f32 0.0, %v836
      %v838 = vpop.f32.mrb[0].mxu0
      %v839 = vpop.f32.mrb[0].mxu0
      %v840 = vadd.f32 0.0, %v839
      %v841 = vpop.f32.mrb[0].mxu0
      %842 = vmatprep.mubr.bf16.mxu0 %v743
      %843 = vmatmul.mubr.bf16.gmra.mrb[0].mxu0 %v742
      %v844 = vpop.f32.mrb[0].mxu0
      %v845 = vadd.f32 0.0, %v844
      %v846 = vpop.f32.mrb[0].mxu0
      %v847 = vpop.f32.mrb[0].mxu0
      %v848 = vadd.f32 0.0, %v847
      %v849 = vpop.f32.mrb[0].mxu0
      %850 = vmatprep.mubr.bf16.mxu0 %v745
      %851 = vmatmul.mubr.bf16.gmra.mrb[0].mxu0 %v744
      %v852 = vpop.f32.mrb[0].mxu0
      %v853 = vadd.f32 0.0, %v852
      %v854 = vpop.f32.mrb[0].mxu0
      %v855 = vpop.f32.mrb[0].mxu0
      %v856 = vadd.f32 0.0, %v855
      %v857 = vpop.f32.mrb[0].mxu0
      %858 = vdwg.mxu0
      %v859 = vadd.f32 %v443, %v797
      %v860 = vadd.f32 %v447, %v800
      %v861 = vadd.f32 %v453, %v805
      %v862 = vadd.f32 %v457, %v808
      %v863 = vadd.f32 %v463, %v813
      %v864 = vadd.f32 %v467, %v816
      %v865 = vadd.f32 %v473, %v821
      %v866 = vadd.f32 %v477, %v824
      %v867 = vadd.f32 %v483, %v829
      %v868 = vadd.f32 %v487, %v832
      %v869 = vadd.f32 %v493, %v837
      %v870 = vadd.f32 %v497, %v840
      %v871 = vadd.f32 %v503, %v845
      %v872 = vadd.f32 %v507, %v848
      %v873 = vadd.f32 %v513, %v853
      %v874 = vadd.f32 %v517, %v856
      %s875 = sld [smem:[#allocation5 + %s21]]
      %p876 = scmp.eq.s32.totalorder %s875, 1
      %p877 = scmp.eq.s32.totalorder %s21, 2
      %p878 = scmp.ne.s32.totalorder %s21, 2
      // Predicated region
      $region37: #{fwd.1} parent=31 // pred_check
        %p879 = pneg %p878
      $region38: #{fwd.1} parent=31 // pred_check_branch
        %881 = sbr.rel (%p879) target = $region40
      $region39: #{fwd.1} parent=31 // pred_region
        // Predicated region
        $region41: #{fwd.1} parent=39 // pred_check
          %p882 = pneg %p876
        $region42: #{fwd.1} parent=39 // pred_check_branch
          %884 = sbr.rel (%p882) target = $region44
        $region43: #{fwd.1} parent=39 // pred_region
          %v885 = vmax.f32 %v859, 0.0
          %v886 = vmax.f32 %v860, 0.0
          %v887 = vmax.f32 %v861, 0.0
          %v888 = vmax.f32 %v862, 0.0
          %v889 = vmax.f32 %v863, 0.0
          %v890 = vmax.f32 %v864, 0.0
          %v891 = vmax.f32 %v865, 0.0
          %v892 = vmax.f32 %v866, 0.0
          %v893 = vmax.f32 %v867, 0.0
          %v894 = vmax.f32 %v868, 0.0
          %v895 = vmax.f32 %v869, 0.0
          %v896 = vmax.f32 %v870, 0.0
          %v897 = vmax.f32 %v871, 0.0
          %v898 = vmax.f32 %v872, 0.0
          %v899 = vmax.f32 %v873, 0.0
          %v900 = vmax.f32 %v874, 0.0
          %v901 = vpack.c.bf16 %v886, %v885
          %v902 = vpack.c.bf16 %v888, %v887
          %v903 = vpack.c.bf16 %v890, %v889
          %v904 = vpack.c.bf16 %v892, %v891
          %v905 = vpack.c.bf16 %v894, %v893
          %v906 = vpack.c.bf16 %v896, %v895
          %v907 = vpack.c.bf16 %v898, %v897
          %v908 = vpack.c.bf16 %v900, %v899
          %909 = vst [vmem:[#allocation2] sm:$0xff] %v901
          %910 = vst [vmem:[#allocation2 + $0x8] sm:$0xff] %v902
          %911 = vst [vmem:[#allocation2 + $0x10] sm:$0xff] %v903
          %912 = vst [vmem:[#allocation2 + $0x18] sm:$0xff] %v904
          %913 = vst [vmem:[#allocation2 + $0x20] sm:$0xff] %v905
          %914 = vst [vmem:[#allocation2 + $0x28] sm:$0xff] %v906
          %915 = vst [vmem:[#allocation2 + $0x30] sm:$0xff] %v907
          %916 = vst [vmem:[#allocation2 + $0x38] sm:$0xff] %v908
        $region44: #{fwd.1} parent=39 // pred_fallthru
          _
        %p917 = scmp.ne.s32.totalorder %s875, 1
        // Predicated region
        $region45: #{fwd.1} parent=39 // pred_check
          %p918 = pneg %p917
        $region46: #{fwd.1} parent=39 // pred_check_branch
          %920 = sbr.rel (%p918) target = $region48
        $region47: #{fwd.1} parent=39 // pred_region
          %v921 = vpack.c.bf16 %v860, %v859
          %v922 = vpack.c.bf16 %v862, %v861
          %v923 = vpack.c.bf16 %v864, %v863
          %v924 = vpack.c.bf16 %v866, %v865
          %v925 = vpack.c.bf16 %v868, %v867
          %v926 = vpack.c.bf16 %v870, %v869
          %v927 = vpack.c.bf16 %v872, %v871
          %v928 = vpack.c.bf16 %v874, %v873
          %929 = vst [vmem:[#allocation2] sm:$0xff] %v921
          %930 = vst [vmem:[#allocation2 + $0x8] sm:$0xff] %v922
          %931 = vst [vmem:[#allocation2 + $0x10] sm:$0xff] %v923
          %932 = vst [vmem:[#allocation2 + $0x18] sm:$0xff] %v924
          %933 = vst [vmem:[#allocation2 + $0x20] sm:$0xff] %v925
          %934 = vst [vmem:[#allocation2 + $0x28] sm:$0xff] %v926
          %935 = vst [vmem:[#allocation2 + $0x30] sm:$0xff] %v927
          %936 = vst [vmem:[#allocation2 + $0x38] sm:$0xff] %v928
        $region48: #{fwd.1} parent=39 // pred_fallthru
          _
      $region40: #{fwd.1} parent=31 // pred_fallthru
        _
      // Predicated region
      $region49: #{fwd.1} parent=31 // pred_check
        %p937 = pneg %p877
      $region50: #{fwd.1} parent=31 // pred_check_branch
        %939 = sbr.rel (%p937) target = $region52
      $region51: #{fwd.1} parent=31 // pred_region
        // Predicated region
        $region53: #{fwd.1} parent=51 // pred_check
          %p940 = pneg %p876
        $region54: #{fwd.1} parent=51 // pred_check_branch
          %942 = sbr.rel (%p940) target = $region56
        $region55: #{fwd.1} parent=51 // pred_region
          %v943 = vmax.f32 %v859, 0.0
          %v944 = vmax.f32 %v860, 0.0
          %v945 = vmax.f32 %v861, 0.0
          %v946 = vmax.f32 %v862, 0.0
          %v947 = vmax.f32 %v863, 0.0
          %v948 = vmax.f32 %v864, 0.0
          %v949 = vmax.f32 %v865, 0.0
          %v950 = vmax.f32 %v866, 0.0
          %v951 = vmax.f32 %v867, 0.0
          %v952 = vmax.f32 %v868, 0.0
          %v953 = vmax.f32 %v869, 0.0
          %v954 = vmax.f32 %v870, 0.0
          %v955 = vmax.f32 %v871, 0.0
          %v956 = vmax.f32 %v872, 0.0
          %v957 = vmax.f32 %v873, 0.0
          %v958 = vmax.f32 %v874, 0.0
          %959 = vst [vmem:[%s4] sm:$0xff] %v943
          %960 = vst [vmem:[%s4 + $0x8] sm:$0xff] %v944
          %961 = vst [vmem:[%s4 + $0x10] sm:$0xff] %v945
          %962 = vst [vmem:[%s4 + $0x18] sm:$0xff] %v946
          %963 = vst [vmem:[%s4 + $0x20] sm:$0xff] %v947
          %964 = vst [vmem:[%s4 + $0x28] sm:$0xff] %v948
          %965 = vst [vmem:[%s4 + $0x30] sm:$0xff] %v949
          %966 = vst [vmem:[%s4 + $0x38] sm:$0xff] %v950
          %967 = vst [vmem:[%s4 + $0x40] sm:$0xff] %v951
          %968 = vst [vmem:[%s4 + $0x48] sm:$0xff] %v952
          %969 = vst [vmem:[%s4 + $0x50] sm:$0xff] %v953
          %970 = vst [vmem:[%s4 + $0x58] sm:$0xff] %v954
          %971 = vst [vmem:[%s4 + $0x60] sm:$0xff] %v955
          %972 = vst [vmem:[%s4 + $0x68] sm:$0xff] %v956
          %973 = vst [vmem:[%s4 + $0x70] sm:$0xff] %v957
          %974 = vst [vmem:[%s4 + $0x78] sm:$0xff] %v958
        $region56: #{fwd.1} parent=51 // pred_fallthru
          _
        %p975 = scmp.ne.s32.totalorder %s875, 1
        // Predicated region
        $region57: #{fwd.1} parent=51 // pred_check
          %p976 = pneg %p975
        $region58: #{fwd.1} parent=51 // pred_check_branch
          %978 = sbr.rel (%p976) target = $region60
        $region59: #{fwd.1} parent=51 // pred_region
          %979 = vst [vmem:[%s4] sm:$0xff] %v859
          %980 = vst [vmem:[%s4 + $0x8] sm:$0xff] %v860
          %981 = vst [vmem:[%s4 + $0x10] sm:$0xff] %v861
          %982 = vst [vmem:[%s4 + $0x18] sm:$0xff] %v862
          %983 = vst [vmem:[%s4 + $0x20] sm:$0xff] %v863
          %984 = vst [vmem:[%s4 + $0x28] sm:$0xff] %v864
          %985 = vst [vmem:[%s4 + $0x30] sm:$0xff] %v865
          %986 = vst [vmem:[%s4 + $0x38] sm:$0xff] %v866
          %987 = vst [vmem:[%s4 + $0x40] sm:$0xff] %v867
          %988 = vst [vmem:[%s4 + $0x48] sm:$0xff] %v868
          %989 = vst [vmem:[%s4 + $0x50] sm:$0xff] %v869
          %990 = vst [vmem:[%s4 + $0x58] sm:$0xff] %v870
          %991 = vst [vmem:[%s4 + $0x60] sm:$0xff] %v871
          %992 = vst [vmem:[%s4 + $0x68] sm:$0xff] %v872
          %993 = vst [vmem:[%s4 + $0x70] sm:$0xff] %v873
          %994 = vst [vmem:[%s4 + $0x78] sm:$0xff] %v874
        $region60: #{fwd.1} parent=51 // pred_fallthru
          _
      $region52: #{fwd.1} parent=31 // pred_fallthru
        _
      // Predicated region
      $region61: #{fwd.1} parent=31 // pred_check
        %p995 = pneg %p102
      $region62: #{fwd.1} parent=31 // pred_check_branch
        %997 = sbr.rel (%p995) target = $region64
      $region63: #{fwd.1} parent=31 // pred_region
        _
      $region64: #{fwd.1} parent=31 // pred_fallthru
        _
      // Predicated region
      $region65: #{fwd.1} parent=31 // pred_check
        %p998 = pneg %p102
      $region66: #{fwd.1} parent=31 // pred_check_branch
        %1000 = sbr.rel (%p998) target = $region68
      $region67: #{fwd.1} parent=31 // pred_region
        _
      $region68: #{fwd.1} parent=31 // pred_fallthru
        _
    $region32: #{fwd.1} parent=5 // pred_fallthru
      _
    %p1001 = scmp.le.s32.totalorder 2, %s16
    // Predicated region
    $region69: #{fwd.1} parent=5 // pred_check
      %p1002 = pneg %p1001
    $region70: #{fwd.1} parent=5 // pred_check_branch
      %1004 = sbr.rel (%p1002) target = $region72
    $region71: #{fwd.1} parent=5 // pred_region
      %s1005 = ssub.s32 %s16, 2
    $region72: #{fwd.1} parent=5 // pred_fallthru
      _
  $region6: #{fwd.1} parent=0 // loop_footer
    %s20 = sadd.s32 1, %s16
  $region7: #{fwd.1} parent=0 // loop_footer_branch
    %15 = sbr.rel target = $region3
  $region8: #{fwd.1} parent=0 // loop_exit
    _

</llo_original>
